<compile_context>
chip_gen: v5e
topology: v5e:2x2
jax: 0.10.0
libtpu: 0.0.40
codegen_flags: <defaults>
</compile_context>

<pallas_src>
import functools

import jax
import jax.numpy as jnp
from jax.experimental import pallas as pl
from jax.experimental.pallas import tpu as pltpu

EPS = 1e-5

# VMEM budget for the pipelined working set (double-buffered in+out blocks in
# the input dtype plus f32 intermediates). 32 MiB is safe on every generation
# (v7x has 64 MiB physical VMEM; v5e/v6e have 128 MiB).
_VMEM_BUDGET_BYTES = 32 * 1024 * 1024
_MAX_BLOCK_ROWS = 1024


def _sublane_pack(dtype):
    itemsize = jnp.dtype(dtype).itemsize
    return {1: 32, 2: 16}.get(itemsize, 8)


def _pick_block_rows(rows, d, dtype):
    """Largest sublane-aligned row block whose pipelined VMEM fits the budget."""
    itemsize = jnp.dtype(dtype).itemsize
    pack = _sublane_pack(dtype)
    # Per-row cost: 2x double-buffered (in + out) blocks in the input dtype
    # (4 * itemsize bytes) plus ~2 f32 intermediates inside the kernel (8 B).
    per_row = d * (4 * itemsize + 8)
    br = max(pack, _VMEM_BUDGET_BYTES // per_row)
    br = min(br, _MAX_BLOCK_ROWS)
    # Never bigger than the (sublane-rounded) number of rows we actually have.
    rows_rounded = ((rows + pack - 1) // pack) * pack
    br = min(br, rows_rounded)
    # Keep a multiple of the sublane packing for full-vreg loads/stores.
    br = max(pack, (br // pack) * pack)
    return int(br)


def _layernorm_bias_kernel(x_ref, w_ref, b_ref, o_ref, *, inv_d):
    # x_ref: (block_rows, D); w_ref/b_ref: (1, D) already f32.
    x = x_ref[...].astype(jnp.float32)
    s = jnp.sum(x, axis=-1, keepdims=True)
    s2 = jnp.sum(x * x, axis=-1, keepdims=True)
    mean = s * inv_d
    var = jnp.maximum(s2 * inv_d - mean * mean, 0.0)
    inv = jax.lax.rsqrt(var + EPS)
    y = (x - mean) * inv
    o_ref[...] = (y * w_ref[...] + b_ref[...]).astype(o_ref.dtype)


def _layernorm_nobias_kernel(x_ref, w_ref, o_ref, *, inv_d):
    x = x_ref[...].astype(jnp.float32)
    s = jnp.sum(x, axis=-1, keepdims=True)
    s2 = jnp.sum(x * x, axis=-1, keepdims=True)
    mean = s * inv_d
    var = jnp.maximum(s2 * inv_d - mean * mean, 0.0)
    inv = jax.lax.rsqrt(var + EPS)
    y = (x - mean) * inv
    o_ref[...] = (y * w_ref[...]).astype(o_ref.dtype)


@functools.partial(jax.jit, static_argnames=("block_rows",))
def layer_norm(x, weight, bias=None, *, block_rows=None):
    """LayerNorm over the last dim of x, eps=1e-5, optional bias."""
    orig_shape = x.shape
    D = orig_shape[-1]
    rows = 1
    for s in orig_shape[:-1]:
        rows *= s
    x2 = x.reshape(rows, D)

    if block_rows is None:
        block_rows = _pick_block_rows(rows, D, x.dtype)

    grid = (pl.cdiv(rows, block_rows),)

    # Pre-cast params to f32 once in the wrapper (kernel math is f32).
    w2 = weight.reshape(1, D).astype(jnp.float32)

    # VMEM limit sized to the chosen block (+ headroom), capped below v7x's
    # 64 MiB physical VMEM.
    itemsize = jnp.dtype(x.dtype).itemsize
    vmem_est = block_rows * D * (4 * itemsize + 8) + 2 * D * 4
    vmem_limit = max(32 * 1024 * 1024, int(vmem_est * 1.25) + (1 << 20))
    vmem_limit = min(vmem_limit, 64 * 1024 * 1024)

    # TODO(synk): for real workloads keep D a multiple of 128 (lane-dense
    # stores); small D like the demo's 32 runs with partially-masked lanes.
    x_spec = pl.BlockSpec((block_rows, D), lambda i: (i, 0))
    p_spec = pl.BlockSpec((1, D), lambda i: (0, 0))
    out_spec = pl.BlockSpec((block_rows, D), lambda i: (i, 0))

    compiler_params = pltpu.CompilerParams(
        dimension_semantics=("parallel",),
        vmem_limit_bytes=vmem_limit,
    )

    inv_d = 1.0 / D

    if bias is not None:
        b2 = bias.reshape(1, D).astype(jnp.float32)
        out = pl.pallas_call(
            functools.partial(_layernorm_bias_kernel, inv_d=inv_d),
            out_shape=jax.ShapeDtypeStruct((rows, D), x.dtype),
            grid_spec=pl.GridSpec(
                grid=grid,
                in_specs=[x_spec, p_spec, p_spec],
                out_specs=out_spec,
            ),
            compiler_params=compiler_params,
        )(x2, w2, b2)
    else:
        out = pl.pallas_call(
            functools.partial(_layernorm_nobias_kernel, inv_d=inv_d),
            out_shape=jax.ShapeDtypeStruct((rows, D), x.dtype),
            grid_spec=pl.GridSpec(
                grid=grid,
                in_specs=[x_spec, p_spec],
                out_specs=out_spec,
            ),
            compiler_params=compiler_params,
        )(x2, w2)

    return out.reshape(orig_shape)


def _reference_layer_norm(x, weight, bias=None):
    mean = jnp.mean(x, axis=-1, keepdims=True)
    var = jnp.mean((x - mean) ** 2, axis=-1, keepdims=True)
    y = (x - mean) * jax.lax.rsqrt(var + EPS) * weight
    if bias is not None:
        y = y + bias
    return y


if __name__ == "__main__":
    # Module: LayerNorm(ndim=hidden, bias=True)
    batch, seq, hidden = 2, 8, 32
    key = jax.random.PRNGKey(0)
    x = jax.random.normal(key, (batch, seq, hidden), dtype=jnp.float32)

    # Deterministic parameter init matching nn.Parameter(torch.ones/zeros(ndim))
    weight = jnp.ones((hidden,), dtype=jnp.float32)
    bias = jnp.zeros((hidden,), dtype=jnp.float32)

    out = layer_norm(x, weight, bias)
    jax.block_until_ready(out)
    ref = _reference_layer_norm(x, weight, bias)
    assert jnp.allclose(out, ref, atol=3e-5, rtol=1e-5), "mismatch vs reference (bias)"

    # Also exercise the bias=None specialization.
    out_nb = layer_norm(x, weight, None)
    jax.block_until_ready(out_nb)
    ref_nb = _reference_layer_norm(x, weight, None)
    assert jnp.allclose(out_nb, ref_nb, atol=3e-5, rtol=1e-5), "mismatch vs reference (no bias)"

    print("KERNEL_OK")
</pallas_src>

<mosaic_0001>
module attributes {stable_mosaic.version = 11 : i64} {
  func.func @_layernorm_bias_kernel(%arg0: i32, %arg1: memref<16x32xf32, #tpu.memory_space<vmem>>, %arg2: memref<1x32xf32, #tpu.memory_space<vmem>>, %arg3: memref<1x32xf32, #tpu.memory_space<vmem>>, %arg4: memref<16x32xf32, #tpu.memory_space<vmem>>) attributes {dimension_semantics = [#tpu.dimension_semantics<parallel>], iteration_bounds = array<i64: 1>, scalar_prefetch = 0 : i64, scratch_operands = 0 : i64, tpu.core_type = #tpu.core_type<tc>, window_params = [{transform_indices = @transform_0, window_bounds = array<i64: 16, 32>}, {pipeline_mode = #tpu.pipeline_mode<synchronous>, transform_indices = @transform_1, window_bounds = array<i64: 1, 32>}, {pipeline_mode = #tpu.pipeline_mode<synchronous>, transform_indices = @transform_2, window_bounds = array<i64: 1, 32>}, {transform_indices = @transform_3, window_bounds = array<i64: 16, 32>}]} {
    %c0 = arith.constant 0 : index
    %c0_0 = arith.constant 0 : index
    %0 = vector.load %arg1[%c0, %c0_0] : memref<16x32xf32, #tpu.memory_space<vmem>>, vector<16x32xf32>
    %cst = arith.constant dense<0.000000e+00> : vector<16xf32>
    %1 = vector.multi_reduction <add>, %0, %cst [1] : vector<16x32xf32> to vector<16xf32>
    %2 = vector.shape_cast %1 : vector<16xf32> to vector<16x1xf32>
    %3 = arith.mulf %0, %0 : vector<16x32xf32>
    %cst_1 = arith.constant dense<0.000000e+00> : vector<16xf32>
    %4 = vector.multi_reduction <add>, %3, %cst_1 [1] : vector<16x32xf32> to vector<16xf32>
    %5 = vector.shape_cast %4 : vector<16xf32> to vector<16x1xf32>
    %cst_2 = arith.constant 3.125000e-02 : f32
    %6 = vector.broadcast %cst_2 : f32 to vector<16x1xf32>
    %7 = arith.mulf %2, %6 : vector<16x1xf32>
    %cst_3 = arith.constant 3.125000e-02 : f32
    %8 = vector.broadcast %cst_3 : f32 to vector<16x1xf32>
    %9 = arith.mulf %5, %8 : vector<16x1xf32>
    %10 = arith.mulf %7, %7 : vector<16x1xf32>
    %11 = arith.subf %9, %10 : vector<16x1xf32>
    %cst_4 = arith.constant 0.000000e+00 : f32
    %12 = vector.broadcast %cst_4 : f32 to vector<16x1xf32>
    %13 = arith.maximumf %11, %12 : vector<16x1xf32>
    %cst_5 = arith.constant 9.99999974E-6 : f32
    %14 = vector.broadcast %cst_5 : f32 to vector<16x1xf32>
    %15 = arith.addf %13, %14 : vector<16x1xf32>
    %16 = math.rsqrt %15 : vector<16x1xf32>
    %17 = vector.broadcast %7 : vector<16x1xf32> to vector<16x32xf32>
    %18 = arith.subf %0, %17 : vector<16x32xf32>
    %19 = vector.broadcast %16 : vector<16x1xf32> to vector<16x32xf32>
    %20 = arith.mulf %18, %19 : vector<16x32xf32>
    %c0_6 = arith.constant 0 : index
    %c0_7 = arith.constant 0 : index
    %21 = vector.load %arg2[%c0_6, %c0_7] : memref<1x32xf32, #tpu.memory_space<vmem>>, vector<1x32xf32>
    %22 = vector.broadcast %21 : vector<1x32xf32> to vector<16x32xf32>
    %23 = arith.mulf %20, %22 : vector<16x32xf32>
    %c0_8 = arith.constant 0 : index
    %c0_9 = arith.constant 0 : index
    %24 = vector.load %arg3[%c0_8, %c0_9] : memref<1x32xf32, #tpu.memory_space<vmem>>, vector<1x32xf32>
    %25 = vector.broadcast %24 : vector<1x32xf32> to vector<16x32xf32>
    %26 = arith.addf %23, %25 : vector<16x32xf32>
    %c0_10 = arith.constant 0 : index
    %c0_11 = arith.constant 0 : index
    %27 = vector.load %arg4[%c0_10, %c0_11] : memref<16x32xf32, #tpu.memory_space<vmem>>, vector<16x32xf32>
    tpu.vector_store %arg4[%c0_10, %c0_11], %26 {strides = array<i32>} : memref<16x32xf32, #tpu.memory_space<vmem>>, vector<16x32xf32>,
    return
  }
  func.func @transform_0(%arg0: i32) -> (i32, i32) {
    %c0_i32 = arith.constant 0 : i32
    %c0_i32_0 = arith.constant 0 : i32
    return %arg0, %c0_i32 : i32, i32
  }
  func.func @transform_1(%arg0: i32) -> (i32, i32) {
    %c0_i32 = arith.constant 0 : i32
    %c0_i32_0 = arith.constant 0 : i32
    %c0_i32_1 = arith.constant 0 : i32
    return %c0_i32, %c0_i32_0 : i32, i32
  }
  func.func @transform_2(%arg0: i32) -> (i32, i32) {
    %c0_i32 = arith.constant 0 : i32
    %c0_i32_0 = arith.constant 0 : i32
    %c0_i32_1 = arith.constant 0 : i32
    return %c0_i32, %c0_i32_0 : i32, i32
  }
  func.func @transform_3(%arg0: i32) -> (i32, i32) {
    %c0_i32 = arith.constant 0 : i32
    %c0_i32_0 = arith.constant 0 : i32
    return %arg0, %c0_i32 : i32, i32
  }
}

</mosaic_0001>

<llo_original>
// kernel: layer_norm.1
$region0: #{layer_norm.1}
  #allocation0 [shape = 'u32[]', space=smem, size = 0x4, offset = 0x4, fixed_abs, tag = 'smem constant byte address 0x4 - core index']
  #allocation1 [shape = 'u32[72,128]{1,0:T(1,128)}', space=vmem, size = 0x9000, scoped, tag = 'internal scratch']
  %s0 = inlined_call_operand.hbm [shape: f32[16,32], index: 0, kind: input, shape index: {}]
  %s1 = inlined_call_operand.vmem [shape: f32[1,32], index: 1, kind: input, shape index: {}]
  %s2 = inlined_call_operand.vmem [shape: f32[1,32], index: 2, kind: input, shape index: {}]
  %s3 = inlined_call_operand.hbm [shape: f32[16,32], index: 3, kind: output, shape index: {}]
  %s4 = sld [smem:[#allocation0]]
  $region26: #{layer_norm.1} parent=0
    _
  %s6 = ssub.s32 1, %s4
  %s7 = scalar_select 0, %s6, %s4
  $region1: #{layer_norm.1} parent=0
    #allocation2 [shape = 'u8[8192]{0}', space=vmem, size = 0x2000, scoped, tag = 'input window, operand 0, single buffered']
    #allocation3 [shape = 's32[1]{0}', space=sflag, size = 0x4, scoped, tag = 'scoped memory for layer_norm.1']
    #allocation4 [shape = 's32[1]{0}', space=sflag, size = 0x4, scoped, tag = 'scoped memory for layer_norm.1']
    #allocation5 [shape = 'u8[8192]{0}', space=vmem, size = 0x2000, scoped, tag = 'output window, operand 0, single buffered']
    %8 = vsyncpa [#allocation3], 0
    %9 = vsyncpa [#allocation4], 0
    // Predicated region
    $region2: #{layer_norm.1} parent=1 // pred_check
      _
    $region3: #{layer_norm.1} parent=1 // pred_check_branch
      %11 = sbr.rel (0) target = $region5
    $region4: #{layer_norm.1} parent=1 // pred_region
      %13 = vsyncadd [#allocation3], 0
      %s14 = sshll.u32 %s0, 4
      %s15 = int_to_ptr.hbm [resolvable:$true] %s14
      %s16 = sshll.u32 [#allocation2], 4
      %s17 = int_to_ptr.vmem [resolvable:$true] %s16
      %22 = dma.hbm_to_vmem [thread:$0]  %s15, 256, %s17, [#allocation3], 128, 128, 8
    $region5: #{layer_norm.1} parent=1 // pred_fallthru
      _
    // Predicated region
    $region6: #{layer_norm.1} parent=1 // pred_check
      _
    $region7: #{layer_norm.1} parent=1 // pred_check_branch
      %24 = sbr.rel (0) target = $region9
    $region8: #{layer_norm.1} parent=1 // pred_region
      _
    $region9: #{layer_norm.1} parent=1 // pred_fallthru
      _
    // Predicated region
    $region10: #{layer_norm.1} parent=1 // pred_check
      _
    $region11: #{layer_norm.1} parent=1 // pred_check_branch
      %26 = sbr.rel (0) target = $region13
    $region12: #{layer_norm.1} parent=1 // pred_region
      _
    $region13: #{layer_norm.1} parent=1 // pred_fallthru
      _
    // Predicated region
    $region14: #{layer_norm.1} parent=1 // pred_check
      _
    $region15: #{layer_norm.1} parent=1 // pred_check_branch
      %28 = sbr.rel (0) target = $region17
    $region16: #{layer_norm.1} parent=1 // pred_region
      %30 = dma.done [#allocation3], 256
    $region17: #{layer_norm.1} parent=1 // pred_fallthru
      _
    %v31 = vld [vmem:[#allocation2] sm:$0xff]
    %v32 = vld [vmem:[#allocation2 + $0x8] sm:$0xff]
    %vm33 = vcmask 261120
    %v34 = vsel %vm33, %v31, 0.0
    %35 = vadd.xlane.f32.xlu0 %v34
    %v36 = vpop.xlane.xlu0 %35
    %v37 = vsel %vm33, %v32, 0.0
    %38 = vadd.xlane.f32.xlu0 %v37
    %v39 = vpop.xlane.xlu0 %38
    %v40 = vmul.f32 %v31, %v31
    %v41 = vmul.f32 %v32, %v32
    %v42 = vsel %vm33, %v40, 0.0
    %43 = vadd.xlane.f32.xlu0 %v42
    %v44 = vpop.xlane.xlu0 %43
    %v45 = vsel %vm33, %v41, 0.0
    %46 = vadd.xlane.f32.xlu0 %v45
    %v47 = vpop.xlane.xlu0 %46
    %v48 = vmul.f32 %v36, 0.03125
    %v49 = vmul.f32 %v39, 0.03125
    %v50 = vmul.f32 %v44, 0.03125
    %v51 = vmul.f32 %v47, 0.03125
    %v52 = vmul.f32 %v48, %v48
    %v53 = vmul.f32 %v49, %v49
    %v54 = vsub.f32 %v50, %v52
    %v55 = vsub.f32 %v51, %v53
    %v56 = vmax.f32 %v54, 0.0
    %v57 = vmax.f32 %v55, 0.0
    %v58 = vadd.f32 %v56, 1e-05
    %v59 = vadd.f32 %v57, 1e-05
    %v60 = vrsqrt.pop %v58
    %v61 = vmul.f32 %v60, %v58
    %v62 = vmul.f32 %v61, %v60
    %v63 = vmul.f32 0.5, %v62
    %v64 = vsub.f32 1.5, %v63
    %v65 = vmul.f32 %v60, %v64
    %vm66 = vweird.f32 %v58
    %vm67 = vweird.f32 %v60
    %vm68 = vmor %vm66, %vm67
    %v69 = vsel %vm68, %v60, %v65
    %v70 = vrsqrt.pop %v59
    %v71 = vmul.f32 %v70, %v59
    %v72 = vmul.f32 %v71, %v70
    %v73 = vmul.f32 0.5, %v72
    %v74 = vsub.f32 1.5, %v73
    %v75 = vmul.f32 %v70, %v74
    %vm76 = vweird.f32 %v59
    %vm77 = vweird.f32 %v70
    %vm78 = vmor %vm76, %vm77
    %v79 = vsel %vm78, %v70, %v75
    %v80 = vsub.f32 %v31, %v48
    %v81 = vsub.f32 %v32, %v49
    %v82 = vmul.f32 %v80, %v69
    %v83 = vmul.f32 %v81, %v79
    %v84 = vld [vmem:[%s1] sm:$0x1]
    %v86 = vperm.slane %v84, 0
    %v88 = vmul.f32 %v82, %v86
    %v89 = vmul.f32 %v83, %v86
    %v90 = vld [vmem:[%s2] sm:$0x1]
    %v92 = vperm.slane %v90, 0
    %v94 = vadd.f32 %v88, %v92
    %v95 = vadd.f32 %v89, %v92
    %96 = vst.msk [vmem:[#allocation5] sm:$0xff] %vm33, %v94
    %97 = vst.msk [vmem:[#allocation5 + $0x8] sm:$0xff] %vm33, %v95
    // Predicated region
    $region18: #{layer_norm.1} parent=1 // pred_check
      _
    $region19: #{layer_norm.1} parent=1 // pred_check_branch
      %99 = sbr.rel (0) target = $region21
    $region20: #{layer_norm.1} parent=1 // pred_region
      %101 = vsyncadd [#allocation4], 0
      %s102 = sshll.u32 [#allocation5], 4
      %s103 = int_to_ptr.vmem [resolvable:$true] %s102
      %s104 = sshll.u32 %s3, 4
      %s105 = int_to_ptr.hbm [resolvable:$true] %s104
      %110 = dma.vmem_to_hbm [thread:$0]  %s103, 256, %s105, [#allocation4], 128, 128, 8
    $region21: #{layer_norm.1} parent=1 // pred_fallthru
      _
    // Predicated region
    $region22: #{layer_norm.1} parent=1 // pred_check
      _
    $region23: #{layer_norm.1} parent=1 // pred_check_branch
      %112 = sbr.rel (0) target = $region25
    $region24: #{layer_norm.1} parent=1 // pred_region
      %114 = dma.done [#allocation4], 256
    $region25: #{layer_norm.1} parent=1 // pred_fallthru
      _
    %115 = vsyncpa [#allocation3], 1
    %116 = vsyncpa [#allocation4], 1

</llo_original>
